<compile_context>
chip_gen: v5e
topology: v5e:2x2
jax: 0.10.0
libtpu: 0.0.40
codegen_flags: <defaults>
</compile_context>

<pallas_src>
import jax
import jax.numpy as jnp
from jax.experimental import pallas as pl
from jax.experimental.pallas import tpu as pltpu


def _make_kernel(C, tm, M, use_vpu_conv, needs_mask):
    def kernel(x_ref, w1_ref, w2s_ref, o_ref, acc_ref):
        # x_ref:   (C, tm)  lane-dense pixel tile
        # w1_ref:  (C, C)   conv1 weight (C_out, C_in); y1 = W1 @ x (no transpose)
        # w2s_ref: (C, 1)   column-sums of conv2 weight (sum over output channels)
        # o_ref:   (1, 1)   scalar output in SMEM
        # acc_ref: (C, tm)  VMEM vector accumulator
        i = pl.program_id(0)

        @pl.when(i == 0)
        def _():
            acc_ref[...] = jnp.zeros_like(acc_ref)

        x = x_ref[...]            # (C, tm) f32
        w1 = w1_ref[...]          # (C, C)

        if use_vpu_conv:
            # Tiny contraction (K = C <= 8): do it as C broadcast FMAs on the VPU
            # instead of a nearly-empty MXU pass.
            y1 = w1[:, 0:1] * x[0:1, :]
            for c in range(1, C):
                y1 = y1 + w1[:, c + 0:c + 1] * x[c + 0:c + 1, :]
        else:
            y1 = jnp.dot(w1, x, preferred_element_type=jnp.float32)

        s = jax.nn.sigmoid(y1)    # (C, tm)

        # conv2 + global sum folded: weight each channel row by colsum(W2)[c].
        weighted = s * w2s_ref[...]   # (C,1) broadcast over lanes

        if needs_mask:
            col = i * tm + jax.lax.broadcasted_iota(jnp.int32, (C, tm), 1)
            weighted = jnp.where(col < M, weighted, jnp.float32(0.0))

        # Vector accumulate only; defer the cross-lane reduce to the last step.
        acc_ref[...] += weighted

        @pl.when(i == pl.num_programs(0) - 1)
        def _():
            o_ref[0, 0] = jnp.sum(acc_ref[...])

    return kernel


def module_forward(x_nchw, w1, w2, *, tm_cap=65536):
    """x_nchw: (N, C, H, W) float32; w1, w2: (C, C, 1, 1) conv weights (no bias)."""
    N, C, H, W = x_nchw.shape
    M = N * H * W

    # NCHW -> (C, M): lane-dense pixel layout (1x1 conv is a per-pixel channel matmul).
    x_cm = jnp.transpose(x_nchw, (1, 0, 2, 3)).reshape(C, M).astype(jnp.float32)

    # Tile size: multiple of 128 lanes, as large as practical (capped so that
    # double-buffered x tiles + accumulator stay well inside v7x's smaller VMEM).
    tm = min(tm_cap, pl.cdiv(M, 128) * 128)
    m_pad = pl.cdiv(M, tm) * tm
    needs_mask = m_pad != M
    if needs_mask:
        x_cm = jnp.pad(x_cm, ((0, 0), (0, m_pad - M)))
    grid = (m_pad // tm,)

    w1_mat = w1.reshape(C, C).astype(jnp.float32)                      # (C_out, C_in)
    w2_colsum = w2.reshape(C, C).sum(axis=0).reshape(C, 1).astype(jnp.float32)

    kernel = _make_kernel(C, tm, M, use_vpu_conv=(C <= 8), needs_mask=needs_mask)

    out = pl.pallas_call(
        kernel,
        out_shape=jax.ShapeDtypeStruct((1, 1), jnp.float32),
        grid_spec=pltpu.PrefetchScalarGridSpec(
            num_scalar_prefetch=0,
            grid=grid,
            in_specs=[
                pl.BlockSpec((C, tm), lambda i: (0, i)),
                pl.BlockSpec((C, C), lambda i: (0, 0)),
                pl.BlockSpec((C, 1), lambda i: (0, 0)),
            ],
            out_specs=pl.BlockSpec(memory_space=pltpu.MemorySpace.SMEM),
            scratch_shapes=[pltpu.VMEM((C, tm), jnp.float32)],
        ),
        compiler_params=pltpu.CompilerParams(
            dimension_semantics=("arbitrary",),  # running reduction over pixel tiles
        ),
    )(x_cm, w1_mat, w2_colsum)
    return out[0, 0]


def module_forward_ref(x_nchw, w1, w2):
    N, C, H, W = x_nchw.shape
    x_flat = jnp.transpose(x_nchw, (0, 2, 3, 1)).reshape(N * H * W, C)
    y1 = x_flat @ w1.reshape(C, C).T
    s = jax.nn.sigmoid(y1)
    y2 = s @ w2.reshape(C, C).T
    return jnp.sum(y2)


if __name__ == "__main__":
    key = jax.random.PRNGKey(0)
    k_x, k_w1, k_w2 = jax.random.split(key, 3)

    N, C, H, W = 2, 4, 16, 16  # ioc = 4
    x = jax.random.normal(k_x, (N, C, H, W), dtype=jnp.float32)
    # deterministic Conv2d-style init (uniform in +/- 1/sqrt(fan_in))
    bound = 1.0 / jnp.sqrt(C * 1 * 1)
    w1 = jax.random.uniform(k_w1, (C, C, 1, 1), jnp.float32, -bound, bound)
    w2 = jax.random.uniform(k_w2, (C, C, 1, 1), jnp.float32, -bound, bound)

    out = module_forward(x, w1, w2)
    out = jax.block_until_ready(out)

    ref = module_forward_ref(x, w1, w2)
    assert jnp.allclose(out, ref, rtol=1e-4, atol=1e-4), (out, ref)

    print("KERNEL_OK")
</pallas_src>

<mosaic_0001>
module attributes {stable_mosaic.version = 11 : i64} {
  func.func @kernel(%arg0: i32, %arg1: memref<4x512xf32, #tpu.memory_space<vmem>>, %arg2: memref<4x4xf32, #tpu.memory_space<vmem>>, %arg3: memref<4x1xf32, #tpu.memory_space<vmem>>, %arg4: memref<1x1xf32, #tpu.memory_space<smem>>, %arg5: memref<4x512xf32, #tpu.memory_space<vmem>>) attributes {dimension_semantics = [#tpu.dimension_semantics<arbitrary>], iteration_bounds = array<i64: 1>, scalar_prefetch = 0 : i64, scratch_operands = 1 : i64, tpu.core_type = #tpu.core_type<tc>, window_params = [{transform_indices = @transform_0, window_bounds = array<i64: 4, 512>}, {pipeline_mode = #tpu.pipeline_mode<synchronous>, transform_indices = @transform_1, window_bounds = array<i64: 4, 4>}, {pipeline_mode = #tpu.pipeline_mode<synchronous>, transform_indices = @transform_2, window_bounds = array<i64: 4, 1>}, {transform_indices = @transform_3, window_bounds = array<i64: 1, 1>}]} {
    %c0_i32 = arith.constant 0 : i32
    %0 = arith.cmpi eq, %arg0, %c0_i32 : i32
    %1 = arith.extui %0 : i1 to i32
    %c0_i32_0 = arith.constant 0 : i32
    %2 = arith.cmpi ne, %1, %c0_i32_0 : i32
    scf.if %2 {
      %cst_12 = arith.constant 0.000000e+00 : f32
      %42 = vector.broadcast %cst_12 : f32 to vector<4x512xf32>
      %c0_13 = arith.constant 0 : index
      %c0_14 = arith.constant 0 : index
      %43 = vector.load %arg5[%c0_13, %c0_14] : memref<4x512xf32, #tpu.memory_space<vmem>>, vector<4x512xf32>
      tpu.vector_store %arg5[%c0_13, %c0_14], %42 {strides = array<i32>} : memref<4x512xf32, #tpu.memory_space<vmem>>, vector<4x512xf32>,
    } else {
    }
    %c0 = arith.constant 0 : index
    %c0_1 = arith.constant 0 : index
    %3 = vector.load %arg1[%c0, %c0_1] : memref<4x512xf32, #tpu.memory_space<vmem>>, vector<4x512xf32>
    %c0_2 = arith.constant 0 : index
    %c0_3 = arith.constant 0 : index
    %4 = vector.load %arg2[%c0_2, %c0_3] : memref<4x4xf32, #tpu.memory_space<vmem>>, vector<4x4xf32>
    %5 = vector.extract_strided_slice %4 {offsets = [0, 0], sizes = [4, 1], strides = [1, 1]} : vector<4x4xf32> to vector<4x1xf32>
    %6 = vector.extract_strided_slice %3 {offsets = [0, 0], sizes = [1, 512], strides = [1, 1]} : vector<4x512xf32> to vector<1x512xf32>
    %7 = vector.broadcast %5 : vector<4x1xf32> to vector<4x512xf32>
    %8 = vector.broadcast %6 : vector<1x512xf32> to vector<4x512xf32>
    %9 = arith.mulf %7, %8 : vector<4x512xf32>
    %10 = vector.extract_strided_slice %4 {offsets = [0, 1], sizes = [4, 1], strides = [1, 1]} : vector<4x4xf32> to vector<4x1xf32>
    %11 = vector.extract_strided_slice %3 {offsets = [1, 0], sizes = [1, 512], strides = [1, 1]} : vector<4x512xf32> to vector<1x512xf32>
    %12 = vector.broadcast %10 : vector<4x1xf32> to vector<4x512xf32>
    %13 = vector.broadcast %11 : vector<1x512xf32> to vector<4x512xf32>
    %14 = arith.mulf %12, %13 : vector<4x512xf32>
    %15 = arith.addf %9, %14 : vector<4x512xf32>
    %16 = vector.extract_strided_slice %4 {offsets = [0, 2], sizes = [4, 1], strides = [1, 1]} : vector<4x4xf32> to vector<4x1xf32>
    %17 = vector.extract_strided_slice %3 {offsets = [2, 0], sizes = [1, 512], strides = [1, 1]} : vector<4x512xf32> to vector<1x512xf32>
    %18 = vector.broadcast %16 : vector<4x1xf32> to vector<4x512xf32>
    %19 = vector.broadcast %17 : vector<1x512xf32> to vector<4x512xf32>
    %20 = arith.mulf %18, %19 : vector<4x512xf32>
    %21 = arith.addf %15, %20 : vector<4x512xf32>
    %22 = vector.extract_strided_slice %4 {offsets = [0, 3], sizes = [4, 1], strides = [1, 1]} : vector<4x4xf32> to vector<4x1xf32>
    %23 = vector.extract_strided_slice %3 {offsets = [3, 0], sizes = [1, 512], strides = [1, 1]} : vector<4x512xf32> to vector<1x512xf32>
    %24 = vector.broadcast %22 : vector<4x1xf32> to vector<4x512xf32>
    %25 = vector.broadcast %23 : vector<1x512xf32> to vector<4x512xf32>
    %26 = arith.mulf %24, %25 : vector<4x512xf32>
    %27 = arith.addf %21, %26 : vector<4x512xf32>
    %28 = arith.negf %27 : vector<4x512xf32>
    %29 = math.exp %28 : vector<4x512xf32>
    %cst = arith.constant 1.000000e+00 : f32
    %30 = vector.broadcast %cst : f32 to vector<4x512xf32>
    %31 = arith.addf %30, %29 : vector<4x512xf32>
    %32 = arith.divf %30, %31 : vector<4x512xf32>
    %c0_4 = arith.constant 0 : index
    %c0_5 = arith.constant 0 : index
    %33 = vector.load %arg3[%c0_4, %c0_5] : memref<4x1xf32, #tpu.memory_space<vmem>>, vector<4x1xf32>
    %34 = vector.broadcast %33 : vector<4x1xf32> to vector<4x512xf32>
    %35 = arith.mulf %32, %34 : vector<4x512xf32>
    %c0_6 = arith.constant 0 : index
    %c0_7 = arith.constant 0 : index
    %36 = vector.load %arg5[%c0_6, %c0_7] : memref<4x512xf32, #tpu.memory_space<vmem>>, vector<4x512xf32>
    %37 = arith.addf %36, %35 : vector<4x512xf32>
    %c0_8 = arith.constant 0 : index
    %c0_9 = arith.constant 0 : index
    %38 = vector.load %arg5[%c0_8, %c0_9] : memref<4x512xf32, #tpu.memory_space<vmem>>, vector<4x512xf32>
    tpu.vector_store %arg5[%c0_8, %c0_9], %37 {strides = array<i32>} : memref<4x512xf32, #tpu.memory_space<vmem>>, vector<4x512xf32>,
    %c0_i32_10 = arith.constant 0 : i32
    %39 = arith.cmpi eq, %arg0, %c0_i32_10 : i32
    %40 = arith.extui %39 : i1 to i32
    %c0_i32_11 = arith.constant 0 : i32
    %41 = arith.cmpi ne, %40, %c0_i32_11 : i32
    scf.if %41 {
      %c0_12 = arith.constant 0 : index
      %c0_13 = arith.constant 0 : index
      %42 = vector.load %arg5[%c0_12, %c0_13] : memref<4x512xf32, #tpu.memory_space<vmem>>, vector<4x512xf32>
      %43 = vector.shape_cast %42 : vector<4x512xf32> to vector<1x4x512xf32>
      %cst_14 = arith.constant dense<0.000000e+00> : vector<1xf32>
      %44 = vector.multi_reduction <add>, %43, %cst_14 [1, 2] : vector<1x4x512xf32> to vector<1xf32>
      %45 = vector.shape_cast %44 : vector<1xf32> to vector<1x1x1xf32>
      %46 = vector.extract %45[0, 0, 0] : f32 from vector<1x1x1xf32>
      %c0_15 = arith.constant 0 : index
      %c0_16 = arith.constant 0 : index
      %47 = memref.load %arg4[%c0_15, %c0_16] : memref<1x1xf32, #tpu.memory_space<smem>>
      memref.store %46, %arg4[%c0_15, %c0_16] : memref<1x1xf32, #tpu.memory_space<smem>>
    } else {
    }
    return
  }
  func.func @transform_0(%arg0: i32) -> (i32, i32) {
    %c0_i32 = arith.constant 0 : i32
    %c0_i32_0 = arith.constant 0 : i32
    return %c0_i32, %arg0 : i32, i32
  }
  func.func @transform_1(%arg0: i32) -> (i32, i32) {
    %c0_i32 = arith.constant 0 : i32
    %c0_i32_0 = arith.constant 0 : i32
    %c0_i32_1 = arith.constant 0 : i32
    return %c0_i32, %c0_i32_0 : i32, i32
  }
  func.func @transform_2(%arg0: i32) -> (i32, i32) {
    %c0_i32 = arith.constant 0 : i32
    %c0_i32_0 = arith.constant 0 : i32
    %c0_i32_1 = arith.constant 0 : i32
    return %c0_i32, %c0_i32_0 : i32, i32
  }
  func.func @transform_3(%arg0: i32) -> (i32, i32) {
    %c0_i32 = arith.constant 0 : i32
    %c0_i32_0 = arith.constant 0 : i32
    %c0_i32_1 = arith.constant 0 : i32
    return %c0_i32, %c0_i32_0 : i32, i32
  }
}

</mosaic_0001>

<llo_original>
// kernel: tpu_custom_call.1
$region0: #{tpu_custom_call.1}
  #allocation0 [shape = 'u32[]', space=smem, size = 0x4, offset = 0x4, fixed_abs, tag = 'smem constant byte address 0x4 - core index']
  #allocation1 [shape = 'u32[72,128]{1,0:T(1,128)}', space=vmem, size = 0x9000, scoped, tag = 'internal scratch']
  #allocation2 [shape = 'f32[4,512]{1,0:T(4,128)}', space=vmem, size = 0x2000, scoped, tag = 'scratch operand']
  %s0 = inlined_call_operand.hbm [shape: f32[4,512], index: 0, kind: input, shape index: {}]
  %s1 = inlined_call_operand.vmem [shape: f32[4,4], index: 1, kind: input, shape index: {}]
  %s2 = inlined_call_operand.vmem [shape: f32[4,1], index: 2, kind: input, shape index: {}]
  %s3 = inlined_call_operand.hbm [shape: f32[1,1], index: 3, kind: output, shape index: {}]
  %s4 = sld [smem:[#allocation0]]
  $region34: #{tpu_custom_call.1} parent=0
    _
  %s6 = ssub.s32 1, %s4
  %s7 = scalar_select 0, %s6, %s4
  $region1: #{tpu_custom_call.1} parent=0
    #allocation3 [shape = 'u8[8192]{0}', space=vmem, size = 0x2000, scoped, tag = 'input window, operand 0, single buffered']
    #allocation4 [shape = 's32[1]{0}', space=sflag, size = 0x4, scoped, tag = 'scoped memory for tpu_custom_call.1']
    #allocation5 [shape = 's32[1]{0}', space=sflag, size = 0x4, scoped, tag = 'scoped memory for tpu_custom_call.1']
    #allocation6 [shape = 'u8[512]{0}', space=smem, size = 0x200, scoped, tag = 'output window, operand 0, single buffered']
    %8 = vsyncpa [#allocation4], 0
    %9 = vsyncpa [#allocation5], 0
    // Predicated region
    $region2: #{tpu_custom_call.1} parent=1 // pred_check
      _
    $region3: #{tpu_custom_call.1} parent=1 // pred_check_branch
      %11 = sbr.rel (0) target = $region5
    $region4: #{tpu_custom_call.1} parent=1 // pred_region
      %13 = vsyncadd [#allocation4], 0
      %s15 = sshll.u32 %s0, 4
      %s16 = int_to_ptr.hbm [resolvable:$true] %s15
      %s17 = sshll.u32 [#allocation3], 4
      %s18 = int_to_ptr.vmem [resolvable:$true] %s17
      %20 = dma.hbm_to_vmem [thread:$0]  %s16, 256, %s18, [#allocation4]
    $region5: #{tpu_custom_call.1} parent=1 // pred_fallthru
      _
    // Predicated region
    $region6: #{tpu_custom_call.1} parent=1 // pred_check
      _
    $region7: #{tpu_custom_call.1} parent=1 // pred_check_branch
      %22 = sbr.rel (0) target = $region9
    $region8: #{tpu_custom_call.1} parent=1 // pred_region
      _
    $region9: #{tpu_custom_call.1} parent=1 // pred_fallthru
      _
    // Predicated region
    $region10: #{tpu_custom_call.1} parent=1 // pred_check
      _
    $region11: #{tpu_custom_call.1} parent=1 // pred_check_branch
      %24 = sbr.rel (0) target = $region13
    $region12: #{tpu_custom_call.1} parent=1 // pred_region
      _
    $region13: #{tpu_custom_call.1} parent=1 // pred_fallthru
      _
    // Predicated region
    $region14: #{tpu_custom_call.1} parent=1 // pred_check
      _
    $region15: #{tpu_custom_call.1} parent=1 // pred_check_branch
      %26 = sbr.rel (0) target = $region17
    $region16: #{tpu_custom_call.1} parent=1 // pred_region
      %28 = dma.done [#allocation4], 256
    $region17: #{tpu_custom_call.1} parent=1 // pred_fallthru
      _
    %p29 = scmp.eq.s32.totalorder 0, 0
    // Predicated region
    $region18: #{tpu_custom_call.1} parent=1 // pred_check
      %p30 = pneg %p29
    $region19: #{tpu_custom_call.1} parent=1 // pred_check_branch
      %32 = sbr.rel (%p30) target = $region21
    $region20: #{tpu_custom_call.1} parent=1 // pred_region
      %33 = vst [vmem:[#allocation2] sm:$0xff] 0.0
      %34 = vst [vmem:[#allocation2 + $0x8] sm:$0xff] 0.0
    $region21: #{tpu_custom_call.1} parent=1 // pred_fallthru
      _
    %v35 = vld [vmem:[#allocation3] sm:$0xff]
    %v36 = vld [vmem:[#allocation3 + $0x8] sm:$0xff]
    %v37 = vld [vmem:[%s1] sm:$0xf]
    %39 = vset.pattern.permute.xlu0 0
    %40 = vperm.xlu0 %39, %v37
    %v41 = vpop.permute.xlu0 %40
    %v45 = vperm.slane %v35, 0
    %v46 = vperm.slane %v35, 4
    %v47 = vperm.slane %v36, 0
    %v48 = vperm.slane %v36, 4
    %v53 = vperm.slane %v45, 0
    %v54 = vperm.slane %v46, 0
    %v55 = vperm.slane %v47, 0
    %v56 = vperm.slane %v48, 0
    %v57 = vmul.f32 %v41, %v53
    %v58 = vmul.f32 %v41, %v54
    %v59 = vmul.f32 %v41, %v55
    %v60 = vmul.f32 %v41, %v56
    %61 = vset.pattern.permute.xlu0 1
    %62 = vperm.xlu0 %61, %v37
    %v63 = vpop.permute.xlu0 %62
    %v65 = vperm.slane %v35, 1
    %v66 = vperm.slane %v35, 5
    %v67 = vperm.slane %v36, 1
    %v68 = vperm.slane %v36, 5
    %v73 = vperm.slane %v65, 1
    %v74 = vperm.slane %v66, 1
    %v75 = vperm.slane %v67, 1
    %v76 = vperm.slane %v68, 1
    %v77 = vmul.f32 %v63, %v73
    %v78 = vmul.f32 %v63, %v74
    %v79 = vmul.f32 %v63, %v75
    %v80 = vmul.f32 %v63, %v76
    %v81 = vadd.f32 %v57, %v77
    %v82 = vadd.f32 %v58, %v78
    %v83 = vadd.f32 %v59, %v79
    %v84 = vadd.f32 %v60, %v80
    %85 = vset.pattern.permute.xlu0 2
    %86 = vperm.xlu0 %85, %v37
    %v87 = vpop.permute.xlu0 %86
    %v89 = vperm.slane %v35, 2
    %v90 = vperm.slane %v35, 6
    %v91 = vperm.slane %v36, 2
    %v92 = vperm.slane %v36, 6
    %v97 = vperm.slane %v89, 2
    %v98 = vperm.slane %v90, 2
    %v99 = vperm.slane %v91, 2
    %v100 = vperm.slane %v92, 2
    %v101 = vmul.f32 %v87, %v97
    %v102 = vmul.f32 %v87, %v98
    %v103 = vmul.f32 %v87, %v99
    %v104 = vmul.f32 %v87, %v100
    %v105 = vadd.f32 %v81, %v101
    %v106 = vadd.f32 %v82, %v102
    %v107 = vadd.f32 %v83, %v103
    %v108 = vadd.f32 %v84, %v104
    %109 = vset.pattern.permute.xlu0 3
    %110 = vperm.xlu0 %109, %v37
    %v111 = vpop.permute.xlu0 %110
    %v113 = vperm.slane %v35, 3
    %v114 = vperm.slane %v35, 7
    %v115 = vperm.slane %v36, 3
    %v116 = vperm.slane %v36, 7
    %v121 = vperm.slane %v113, 3
    %v122 = vperm.slane %v114, 3
    %v123 = vperm.slane %v115, 3
    %v124 = vperm.slane %v116, 3
    %v125 = vmul.f32 %v111, %v121
    %v126 = vmul.f32 %v111, %v122
    %v127 = vmul.f32 %v111, %v123
    %v128 = vmul.f32 %v111, %v124
    %v129 = vadd.f32 %v105, %v125
    %v130 = vadd.f32 %v106, %v126
    %v131 = vadd.f32 %v107, %v127
    %v132 = vadd.f32 %v108, %v128
    %v133 = vxor.u32 %v129, 2147483648
    %v134 = vxor.u32 %v130, 2147483648
    %v135 = vxor.u32 %v131, 2147483648
    %v136 = vxor.u32 %v132, 2147483648
    %v137 = vmul.f32 %v133, 1.442695
    %v138 = vpow.pop %v137
    %v139 = vmul.f32 %v134, 1.442695
    %v140 = vpow.pop %v139
    %v141 = vmul.f32 %v135, 1.442695
    %v142 = vpow.pop %v141
    %v143 = vmul.f32 %v136, 1.442695
    %v144 = vpow.pop %v143
    %v145 = vadd.f32 %v138, 1.0
    %v146 = vadd.f32 %v140, 1.0
    %v147 = vadd.f32 %v142, 1.0
    %v148 = vadd.f32 %v144, 1.0
    %v149 = vrcp.pop %v145
    %v150 = vmul.f32 %v145, %v149
    %v151 = vsub.f32 1.0, %v150
    %v152 = vmul.f32 %v149, %v151
    %v153 = vadd.f32 %v149, %v152
    %vm154 = vweird.f32 %v145
    %vm155 = vweird.f32 %v149
    %vm156 = vmor %vm154, %vm155
    %v157 = vsel %vm156, %v149, %v153
    %v158 = vand.u32 2147483647, %v145
    %vm159 = vcmp.eq.f32.partialorder %v158, 8.507059e+37
    %v160 = vand.u32 %v145, 2147483648
    %v161 = vor.u32 1.1754944e-38, %v160
    %v162 = vsel %vm159, %v161, %v157
    %v163 = vmul.f32 1.0, %v162
    %v164 = vrcp.pop %v146
    %v165 = vmul.f32 %v146, %v164
    %v166 = vsub.f32 1.0, %v165
    %v167 = vmul.f32 %v164, %v166
    %v168 = vadd.f32 %v164, %v167
    %vm169 = vweird.f32 %v146
    %vm170 = vweird.f32 %v164
    %vm171 = vmor %vm169, %vm170
    %v172 = vsel %vm171, %v164, %v168
    %v173 = vand.u32 2147483647, %v146
    %vm174 = vcmp.eq.f32.partialorder %v173, 8.507059e+37
    %v175 = vand.u32 %v146, 2147483648
    %v176 = vor.u32 1.1754944e-38, %v175
    %v177 = vsel %vm174, %v176, %v172
    %v178 = vmul.f32 1.0, %v177
    %v179 = vrcp.pop %v147
    %v180 = vmul.f32 %v147, %v179
    %v181 = vsub.f32 1.0, %v180
    %v182 = vmul.f32 %v179, %v181
    %v183 = vadd.f32 %v179, %v182
    %vm184 = vweird.f32 %v147
    %vm185 = vweird.f32 %v179
    %vm186 = vmor %vm184, %vm185
    %v187 = vsel %vm186, %v179, %v183
    %v188 = vand.u32 2147483647, %v147
    %vm189 = vcmp.eq.f32.partialorder %v188, 8.507059e+37
    %v190 = vand.u32 %v147, 2147483648
    %v191 = vor.u32 1.1754944e-38, %v190
    %v192 = vsel %vm189, %v191, %v187
    %v193 = vmul.f32 1.0, %v192
    %v194 = vrcp.pop %v148
    %v195 = vmul.f32 %v148, %v194
    %v196 = vsub.f32 1.0, %v195
    %v197 = vmul.f32 %v194, %v196
    %v198 = vadd.f32 %v194, %v197
    %vm199 = vweird.f32 %v148
    %vm200 = vweird.f32 %v194
    %vm201 = vmor %vm199, %vm200
    %v202 = vsel %vm201, %v194, %v198
    %v203 = vand.u32 2147483647, %v148
    %vm204 = vcmp.eq.f32.partialorder %v203, 8.507059e+37
    %v205 = vand.u32 %v148, 2147483648
    %v206 = vor.u32 1.1754944e-38, %v205
    %v207 = vsel %vm204, %v206, %v202
    %v208 = vmul.f32 1.0, %v207
    %v209 = vld [vmem:[%s2] sm:$0xf]
    %211 = vset.pattern.permute.xlu0 0
    %212 = vperm.xlu0 %211, %v209
    %v213 = vpop.permute.xlu0 %212
    %v215 = vmul.f32 %v163, %v213
    %v216 = vmul.f32 %v178, %v213
    %v217 = vmul.f32 %v193, %v213
    %v218 = vmul.f32 %v208, %v213
    %v219 = vld [vmem:[#allocation2] sm:$0xff]
    %v220 = vld [vmem:[#allocation2 + $0x8] sm:$0xff]
    %v225 = vrot.slane %v216, 4
    %v226 = vrot.slane %v218, 4
    %vm227 = vcmask 1043456
    %v228 = vsel %vm227, %v215, %v225
    %v229 = vsel %vm227, %v217, %v226
    %v232 = vadd.f32 %v219, %v228
    %v233 = vadd.f32 %v220, %v229
    %234 = vst [vmem:[#allocation2] sm:$0xff] %v232
    %235 = vst [vmem:[#allocation2 + $0x8] sm:$0xff] %v233
    // Predicated region
    $region22: #{tpu_custom_call.1} parent=1 // pred_check
      %p236 = pneg %p29
    $region23: #{tpu_custom_call.1} parent=1 // pred_check_branch
      %238 = sbr.rel (%p236) target = $region25
    $region24: #{tpu_custom_call.1} parent=1 // pred_region
      %v239 = vld [vmem:[#allocation2] sm:$0xff]
      %v240 = vld [vmem:[#allocation2 + $0x8] sm:$0xff]
      %243 = vst [vmem:[#allocation1] ss:$2 sm:$0xff] %v239
      %s244 = scalar_lea.vmem [#allocation1], 16
      %245 = vst [vmem:[%s244] ss:$2 sm:$0xff] %v240
      %v246 = vld.sshfl [vmem:[#allocation1] sm:$0xff pattern:$0x75316420]
      %v247 = vld.sshfl [vmem:[#allocation1 + $0x8] sm:$0xff pattern:$0x75316420]
      %v248 = vld.sshfl [vmem:[#allocation1 + $0x10] sm:$0xff pattern:$0x75316420]
      %v249 = vld.sshfl [vmem:[#allocation1 + $0x18] sm:$0xff pattern:$0x75316420]
      %v254 = vsel %vm227, %v246, 0.0
      %v255 = vsel %vm227, %v247, 0.0
      %v256 = vadd.f32 %v254, %v255
      %v257 = vsel %vm227, %v248, 0.0
      %v258 = vadd.f32 %v256, %v257
      %v259 = vsel %vm227, %v249, 0.0
      %v260 = vadd.f32 %v258, %v259
      %261 = vadd.xlane.f32.xlu0 %v260
      %v262 = vpop.xlane.xlu0 %261
      %v263 = vrot.slane %v262, 4
      %v264 = vadd.f32 %v262, %v263
      %v265 = vrot.slane %v264, 2
      %v266 = vadd.f32 %v264, %v265
      %v267 = vrot.slane %v266, 1
      %v268 = vadd.f32 %v266, %v267
      %s269 = vtos %v268
      %s270 = scalar_lea.smem [#allocation6], 0
      %271 = sst [smem:[%s270]] %s269
    $region25: #{tpu_custom_call.1} parent=1 // pred_fallthru
      _
    // Predicated region
    $region26: #{tpu_custom_call.1} parent=1 // pred_check
      _
    $region27: #{tpu_custom_call.1} parent=1 // pred_check_branch
      %273 = sbr.rel (0) target = $region29
    $region28: #{tpu_custom_call.1} parent=1 // pred_region
      %275 = vsyncadd [#allocation5], 0
      %s277 = sshll.u32 %s3, 4
      %s278 = int_to_ptr.hbm [resolvable:$true] %s277
      %280 = dma.smem_to_hbm [#allocation6], 16, %s278, [#allocation5]
    $region29: #{tpu_custom_call.1} parent=1 // pred_fallthru
      _
    // Predicated region
    $region30: #{tpu_custom_call.1} parent=1 // pred_check
      _
    $region31: #{tpu_custom_call.1} parent=1 // pred_check_branch
      %282 = sbr.rel (0) target = $region33
    $region32: #{tpu_custom_call.1} parent=1 // pred_region
      %284 = dma.done [#allocation5], 16
    $region33: #{tpu_custom_call.1} parent=1 // pred_fallthru
      _
    %285 = sfence
    %286 = vsyncpa [#allocation4], 1
    %287 = vsyncpa [#allocation5], 1

</llo_original>
